<compile_context>
chip_gen: v7x
topology: tpu7x:2x2x1
jax: 0.10.0
libtpu: 0.0.40
codegen_flags: <defaults>
</compile_context>

<pallas_src>
import functools

import jax
import jax.numpy as jnp
from jax.experimental import pallas as pl
from jax.experimental.pallas import tpu as pltpu


def _round_up(v, m):
    return ((v + m - 1) // m) * m


def _conv3x3_leaky_kernel(x_ref, w_ref, b_ref, o_ref, stk_ref, *, shifts, neg_slope):
    """One (batch, row-tile) per grid step.

    x_ref:   (1, 1, Cin_p, Lin)      zero-padded input tile (rows with halo, flattened lanes)
    w_ref:   (Cout_p, 9*Cin_p)       stacked-tap weights, tap-major over input channel
    b_ref:   (Cout_p, 1)             bias
    o_ref:   (1, Cout_p, Lt_pad)     output tile on the padded-row grid (lane-dense)
    stk_ref: (9*Cin_p, Lt_pad)       VMEM scratch for the stacked im2col operand
    """
    cin_p = x_ref.shape[2]
    lt = o_ref.shape[2]
    # Fused im2col: 9 statically-shifted windows stacked along the contraction axis.
    for t, s in enumerate(shifts):
        stk_ref[t * cin_p:(t + 1) * cin_p, :] = x_ref[0, 0, :, s:s + lt]
    # One MXU matmul (K = 9*Cin_p) + fused bias + LeakyReLU epilogue.
    z = jnp.dot(w_ref[...], stk_ref[...], preferred_element_type=jnp.float32) + b_ref[...]
    o_ref[0] = jnp.maximum(z, neg_slope * z).astype(o_ref.dtype)


def pred_image_forward(x, w, b, neg_slope=0.1, target_lanes=1024):
    """LeakyReLU(0.1)(Conv2d(k=3, s=1, p=1)(x)); NCHW in / NCHW out, f32."""
    B, Cin, H, W = x.shape
    Cout, Cin2, kh, kw = w.shape
    assert (Cin2, kh, kw) == (Cin, 3, 3)

    Wp = W + 2                                  # padded row stride (lane layout unit)
    Cin_p, Cout_p = _round_up(Cin, 8), _round_up(Cout, 8)

    # --- spatial row tiling (targets ~target_lanes lanes / tile; tiny per-step VMEM) ---
    Ht = max(1, min(H, target_lanes // Wp))     # output rows per tile
    R = -(-H // Ht)                             # number of row tiles
    Lt = Ht * Wp                                # valid outputs per tile (padded-row grid)
    Lt_pad = _round_up(Lt, 128)                 # lane-dense output block width
    max_shift = 2 * Wp + 2                      # largest tap offset
    rows_in = -(-(max_shift + Lt_pad) // Wp)    # input rows per tile (halo + static-slice tail)
    Lin = rows_in * Wp
    shifts = tuple(ky * Wp + kx for ky in range(3) for kx in range(3))   # tap t = ky*3+kx

    # --- single zero-pad (spatial halo + channel pad + bottom tail rows), then overlapped
    #     row tiles so every in-kernel slice offset is static ---
    rows_total = (R - 1) * Ht + rows_in
    pad_bottom = rows_total - H - 1
    xp = jnp.pad(x.astype(jnp.float32),
                 ((0, 0), (0, Cin_p - Cin), (1, pad_bottom), (1, 1)))
    if R == 1:
        xt = xp.reshape(B, 1, Cin_p, Lin)
    else:
        xt = jnp.stack([xp[:, :, r * Ht:r * Ht + rows_in, :] for r in range(R)], axis=1)
        xt = xt.reshape(B, R, Cin_p, Lin)

    # --- weights reshaped host-side to (Cout_p, 9*Cin_p), tap-major over channel ---
    wt = jnp.transpose(w, (0, 2, 3, 1))                          # (Cout, ky, kx, Cin)
    wt = jnp.pad(wt, ((0, Cout_p - Cout), (0, 0), (0, 0), (0, Cin_p - Cin)))
    w2 = wt.reshape(Cout_p, 9 * Cin_p).astype(jnp.float32)
    b2 = jnp.pad(b.reshape(Cout, 1), ((0, Cout_p - Cout), (0, 0))).astype(jnp.float32)

    out = pl.pallas_call(
        functools.partial(_conv3x3_leaky_kernel, shifts=shifts, neg_slope=neg_slope),
        out_shape=jax.ShapeDtypeStruct((B, Cout_p, R * Lt_pad), jnp.float32),
        grid=(B, R),
        in_specs=[
            pl.BlockSpec((1, 1, Cin_p, Lin), lambda bb, rr: (bb, rr, 0, 0)),
            pl.BlockSpec((Cout_p, 9 * Cin_p), lambda bb, rr: (0, 0)),   # resident
            pl.BlockSpec((Cout_p, 1), lambda bb, rr: (0, 0)),           # resident
        ],
        out_specs=pl.BlockSpec((1, Cout_p, Lt_pad), lambda bb, rr: (bb, 0, rr)),
        scratch_shapes=[pltpu.VMEM((9 * Cin_p, Lt_pad), jnp.float32)],
        compiler_params=pltpu.CompilerParams(
            dimension_semantics=("parallel", "parallel"),
            vmem_limit_bytes=48 * 1024 * 1024),
    )(xt, w2, b2)

    # Drop padded channels, the per-tile lane padding, and the 2 padded columns per row.
    y = out[:, :Cout].reshape(B, Cout, R, Lt_pad)[:, :, :, :Lt]
    y = y.reshape(B, Cout, R * Ht, Wp)[:, :, :H, :W]
    return y


def _reference(x, w, b, neg_slope=0.1):
    y = jax.lax.conv_general_dilated(
        x, w, window_strides=(1, 1), padding=((1, 1), (1, 1)),
        dimension_numbers=("NCHW", "OIHW", "NCHW"),
        precision=jax.lax.Precision.HIGHEST)
    y = y + b.reshape(1, -1, 1, 1)
    return jnp.where(y >= 0.0, y, neg_slope * y)


if __name__ == "__main__":
    B, nc_in, nc_out, H, W = 2, 4, 3, 16, 16
    key = jax.random.PRNGKey(0)
    k_x, k_w = jax.random.split(key)
    x = jax.random.normal(k_x, (B, nc_in, H, W), jnp.float32)
    # xavier_normal_ weight init, zero bias (matches Pred_image.__init__)
    fan_in, fan_out = nc_in * 9, nc_out * 9
    std = (2.0 / (fan_in + fan_out)) ** 0.5
    w = jax.random.normal(k_w, (nc_out, nc_in, 3, 3), jnp.float32) * std
    b = jnp.zeros((nc_out,), jnp.float32)

    out = jax.block_until_ready(jax.jit(pred_image_forward)(x, w, b))
    ref = jax.block_until_ready(_reference(x, w, b))

    assert out.shape == (B, nc_out, H, W), out.shape
    err = float(jnp.max(jnp.abs(out - ref)))
    assert err < 5e-2, f"max abs err vs reference: {err}"
    print("KERNEL_OK")
</pallas_src>

<mosaic_0001>
module attributes {stable_mosaic.version = 11 : i64} {
  func.func @_conv3x3_leaky_kernel(%arg0: i32, %arg1: i32, %arg2: memref<1x1x8x432xf32, #tpu.memory_space<vmem>>, %arg3: memref<8x72xf32, #tpu.memory_space<vmem>>, %arg4: memref<8x1xf32, #tpu.memory_space<vmem>>, %arg5: memref<1x8x384xf32, #tpu.memory_space<vmem>>, %arg6: memref<72x384xf32, #tpu.memory_space<vmem>>) attributes {dimension_semantics = [#tpu.dimension_semantics<parallel>, #tpu.dimension_semantics<parallel>], iteration_bounds = array<i64: 2, 1>, scalar_prefetch = 0 : i64, scratch_operands = 1 : i64, tpu.core_type = #tpu.core_type<tc>, window_params = [{transform_indices = @transform_0, window_bounds = array<i64: 1, 1, 8, 432>}, {pipeline_mode = #tpu.pipeline_mode<synchronous>, transform_indices = @transform_1, window_bounds = array<i64: 8, 72>}, {pipeline_mode = #tpu.pipeline_mode<synchronous>, transform_indices = @transform_2, window_bounds = array<i64: 8, 1>}, {transform_indices = @transform_3, window_bounds = array<i64: 1, 8, 384>}]} {
    %c0 = arith.constant 0 : index
    %c0_0 = arith.constant 0 : index
    %c0_1 = arith.constant 0 : index
    %c0_2 = arith.constant 0 : index
    %0 = vector.load %arg2[%c0, %c0_0, %c0_1, %c0_2] : memref<1x1x8x432xf32, #tpu.memory_space<vmem>>, vector<1x1x8x384xf32>
    %1 = vector.shape_cast %0 : vector<1x1x8x384xf32> to vector<8x384xf32>
    %c0_3 = arith.constant 0 : index
    %c0_4 = arith.constant 0 : index
    %2 = vector.load %arg6[%c0_3, %c0_4] : memref<72x384xf32, #tpu.memory_space<vmem>>, vector<8x384xf32>
    tpu.vector_store %arg6[%c0_3, %c0_4], %1 {strides = array<i32>} : memref<72x384xf32, #tpu.memory_space<vmem>>, vector<8x384xf32>,
    %c0_5 = arith.constant 0 : index
    %c0_6 = arith.constant 0 : index
    %c0_7 = arith.constant 0 : index
    %c1 = arith.constant 1 : index
    %3 = vector.load %arg2[%c0_5, %c0_6, %c0_7, %c1] : memref<1x1x8x432xf32, #tpu.memory_space<vmem>>, vector<1x1x8x384xf32>
    %4 = vector.shape_cast %3 : vector<1x1x8x384xf32> to vector<8x384xf32>
    %c8 = arith.constant 8 : index
    %c0_8 = arith.constant 0 : index
    %5 = vector.load %arg6[%c8, %c0_8] : memref<72x384xf32, #tpu.memory_space<vmem>>, vector<8x384xf32>
    tpu.vector_store %arg6[%c8, %c0_8], %4 {strides = array<i32>} : memref<72x384xf32, #tpu.memory_space<vmem>>, vector<8x384xf32>,
    %c0_9 = arith.constant 0 : index
    %c0_10 = arith.constant 0 : index
    %c0_11 = arith.constant 0 : index
    %c2 = arith.constant 2 : index
    %6 = vector.load %arg2[%c0_9, %c0_10, %c0_11, %c2] : memref<1x1x8x432xf32, #tpu.memory_space<vmem>>, vector<1x1x8x384xf32>
    %7 = vector.shape_cast %6 : vector<1x1x8x384xf32> to vector<8x384xf32>
    %c16 = arith.constant 16 : index
    %c0_12 = arith.constant 0 : index
    %8 = vector.load %arg6[%c16, %c0_12] : memref<72x384xf32, #tpu.memory_space<vmem>>, vector<8x384xf32>
    tpu.vector_store %arg6[%c16, %c0_12], %7 {strides = array<i32>} : memref<72x384xf32, #tpu.memory_space<vmem>>, vector<8x384xf32>,
    %c0_13 = arith.constant 0 : index
    %c0_14 = arith.constant 0 : index
    %c0_15 = arith.constant 0 : index
    %c18 = arith.constant 18 : index
    %9 = vector.load %arg2[%c0_13, %c0_14, %c0_15, %c18] : memref<1x1x8x432xf32, #tpu.memory_space<vmem>>, vector<1x1x8x384xf32>
    %10 = vector.shape_cast %9 : vector<1x1x8x384xf32> to vector<8x384xf32>
    %c24 = arith.constant 24 : index
    %c0_16 = arith.constant 0 : index
    %11 = vector.load %arg6[%c24, %c0_16] : memref<72x384xf32, #tpu.memory_space<vmem>>, vector<8x384xf32>
    tpu.vector_store %arg6[%c24, %c0_16], %10 {strides = array<i32>} : memref<72x384xf32, #tpu.memory_space<vmem>>, vector<8x384xf32>,
    %c0_17 = arith.constant 0 : index
    %c0_18 = arith.constant 0 : index
    %c0_19 = arith.constant 0 : index
    %c19 = arith.constant 19 : index
    %12 = vector.load %arg2[%c0_17, %c0_18, %c0_19, %c19] : memref<1x1x8x432xf32, #tpu.memory_space<vmem>>, vector<1x1x8x384xf32>
    %13 = vector.shape_cast %12 : vector<1x1x8x384xf32> to vector<8x384xf32>
    %c32 = arith.constant 32 : index
    %c0_20 = arith.constant 0 : index
    %14 = vector.load %arg6[%c32, %c0_20] : memref<72x384xf32, #tpu.memory_space<vmem>>, vector<8x384xf32>
    tpu.vector_store %arg6[%c32, %c0_20], %13 {strides = array<i32>} : memref<72x384xf32, #tpu.memory_space<vmem>>, vector<8x384xf32>,
    %c0_21 = arith.constant 0 : index
    %c0_22 = arith.constant 0 : index
    %c0_23 = arith.constant 0 : index
    %c20 = arith.constant 20 : index
    %15 = vector.load %arg2[%c0_21, %c0_22, %c0_23, %c20] : memref<1x1x8x432xf32, #tpu.memory_space<vmem>>, vector<1x1x8x384xf32>
    %16 = vector.shape_cast %15 : vector<1x1x8x384xf32> to vector<8x384xf32>
    %c40 = arith.constant 40 : index
    %c0_24 = arith.constant 0 : index
    %17 = vector.load %arg6[%c40, %c0_24] : memref<72x384xf32, #tpu.memory_space<vmem>>, vector<8x384xf32>
    tpu.vector_store %arg6[%c40, %c0_24], %16 {strides = array<i32>} : memref<72x384xf32, #tpu.memory_space<vmem>>, vector<8x384xf32>,
    %c0_25 = arith.constant 0 : index
    %c0_26 = arith.constant 0 : index
    %c0_27 = arith.constant 0 : index
    %c36 = arith.constant 36 : index
    %18 = vector.load %arg2[%c0_25, %c0_26, %c0_27, %c36] : memref<1x1x8x432xf32, #tpu.memory_space<vmem>>, vector<1x1x8x384xf32>
    %19 = vector.shape_cast %18 : vector<1x1x8x384xf32> to vector<8x384xf32>
    %c48 = arith.constant 48 : index
    %c0_28 = arith.constant 0 : index
    %20 = vector.load %arg6[%c48, %c0_28] : memref<72x384xf32, #tpu.memory_space<vmem>>, vector<8x384xf32>
    tpu.vector_store %arg6[%c48, %c0_28], %19 {strides = array<i32>} : memref<72x384xf32, #tpu.memory_space<vmem>>, vector<8x384xf32>,
    %c0_29 = arith.constant 0 : index
    %c0_30 = arith.constant 0 : index
    %c0_31 = arith.constant 0 : index
    %c37 = arith.constant 37 : index
    %21 = vector.load %arg2[%c0_29, %c0_30, %c0_31, %c37] : memref<1x1x8x432xf32, #tpu.memory_space<vmem>>, vector<1x1x8x384xf32>
    %22 = vector.shape_cast %21 : vector<1x1x8x384xf32> to vector<8x384xf32>
    %c56 = arith.constant 56 : index
    %c0_32 = arith.constant 0 : index
    %23 = vector.load %arg6[%c56, %c0_32] : memref<72x384xf32, #tpu.memory_space<vmem>>, vector<8x384xf32>
    tpu.vector_store %arg6[%c56, %c0_32], %22 {strides = array<i32>} : memref<72x384xf32, #tpu.memory_space<vmem>>, vector<8x384xf32>,
    %c0_33 = arith.constant 0 : index
    %c0_34 = arith.constant 0 : index
    %c0_35 = arith.constant 0 : index
    %c38 = arith.constant 38 : index
    %24 = vector.load %arg2[%c0_33, %c0_34, %c0_35, %c38] : memref<1x1x8x432xf32, #tpu.memory_space<vmem>>, vector<1x1x8x384xf32>
    %25 = vector.shape_cast %24 : vector<1x1x8x384xf32> to vector<8x384xf32>
    %c64 = arith.constant 64 : index
    %c0_36 = arith.constant 0 : index
    %26 = vector.load %arg6[%c64, %c0_36] : memref<72x384xf32, #tpu.memory_space<vmem>>, vector<8x384xf32>
    tpu.vector_store %arg6[%c64, %c0_36], %25 {strides = array<i32>} : memref<72x384xf32, #tpu.memory_space<vmem>>, vector<8x384xf32>,
    %c0_37 = arith.constant 0 : index
    %c0_38 = arith.constant 0 : index
    %27 = vector.load %arg3[%c0_37, %c0_38] : memref<8x72xf32, #tpu.memory_space<vmem>>, vector<8x72xf32>
    %c0_39 = arith.constant 0 : index
    %c0_40 = arith.constant 0 : index
    %28 = vector.load %arg6[%c0_39, %c0_40] : memref<72x384xf32, #tpu.memory_space<vmem>>, vector<72x384xf32>
    %cst = arith.constant dense<0.000000e+00> : vector<8x384xf32>
    %29 = tpu.matmul %27, %28, %cst {dimension_numbers = #tpu.dot_dimension_numbers<[1], [0], [0], [1], [0, 0, 1, 1], [], []>} : vector<8x72xf32>, vector<72x384xf32>, vector<8x384xf32> -> vector<8x384xf32>
    %c0_41 = arith.constant 0 : index
    %c0_42 = arith.constant 0 : index
    %30 = vector.load %arg4[%c0_41, %c0_42] : memref<8x1xf32, #tpu.memory_space<vmem>>, vector<8x1xf32>
    %31 = vector.broadcast %30 : vector<8x1xf32> to vector<8x384xf32>
    %32 = arith.addf %29, %31 : vector<8x384xf32>
    %cst_43 = arith.constant 1.000000e-01 : f32
    %33 = vector.broadcast %cst_43 : f32 to vector<8x384xf32>
    %34 = arith.mulf %33, %32 : vector<8x384xf32>
    %35 = arith.maximumf %32, %34 : vector<8x384xf32>
    %c0_44 = arith.constant 0 : index
    %c0_45 = arith.constant 0 : index
    %c0_46 = arith.constant 0 : index
    %36 = vector.load %arg5[%c0_44, %c0_45, %c0_46] : memref<1x8x384xf32, #tpu.memory_space<vmem>>, vector<1x8x384xf32>
    %37 = vector.shape_cast %36 : vector<1x8x384xf32> to vector<8x384xf32>
    %38 = vector.shape_cast %35 : vector<8x384xf32> to vector<1x8x384xf32>
    tpu.vector_store %arg5[%c0_44, %c0_45, %c0_46], %38 {strides = array<i32>} : memref<1x8x384xf32, #tpu.memory_space<vmem>>, vector<1x8x384xf32>,
    return
  }
  func.func @transform_0(%arg0: i32, %arg1: i32) -> (i32, i32, i32, i32) {
    %c0_i32 = arith.constant 0 : i32
    %c0_i32_0 = arith.constant 0 : i32
    %c0_i32_1 = arith.constant 0 : i32
    return %arg0, %arg1, %c0_i32, %c0_i32_0 : i32, i32, i32, i32
  }
  func.func @transform_1(%arg0: i32, %arg1: i32) -> (i32, i32) {
    %c0_i32 = arith.constant 0 : i32
    %c0_i32_0 = arith.constant 0 : i32
    %c0_i32_1 = arith.constant 0 : i32
    return %c0_i32, %c0_i32_0 : i32, i32
  }
  func.func @transform_2(%arg0: i32, %arg1: i32) -> (i32, i32) {
    %c0_i32 = arith.constant 0 : i32
    %c0_i32_0 = arith.constant 0 : i32
    %c0_i32_1 = arith.constant 0 : i32
    return %c0_i32, %c0_i32_0 : i32, i32
  }
  func.func @transform_3(%arg0: i32, %arg1: i32) -> (i32, i32, i32) {
    %c0_i32 = arith.constant 0 : i32
    %c0_i32_0 = arith.constant 0 : i32
    return %arg0, %c0_i32, %arg1 : i32, i32, i32
  }
}

</mosaic_0001>

<llo_original>
// kernel: pred_image_forward.1
$region0: #{pred_image_forward.1}
  #allocation0 [shape = 'u32[]', space=smem, size = 0x4, offset = 0x4, fixed_abs, tag = 'smem constant byte address 0x4 - core index']
  #allocation1 [shape = 'u32[144,128]{1,0:T(1,128)}', space=vmem, size = 0x12000, scoped, tag = 'internal scratch']
  #allocation2 [shape = 'f32[72,384]{1,0:T(8,128)}', space=vmem, size = 0x1b000, scoped, tag = 'scratch operand']
  %s0 = inlined_call_operand.vmem [shape: f32[2,1,8,432], index: 0, kind: input, shape index: {}]
  %s1 = inlined_call_operand.vmem [shape: f32[8,72], index: 1, kind: input, shape index: {}]
  %s2 = inlined_call_operand.vmem [shape: f32[8,1], index: 2, kind: input, shape index: {}]
  %s3 = inlined_call_operand.vmem [shape: f32[2,8,384], index: 3, kind: output, shape index: {}]
  %s4 = sld [smem:[#allocation0]]
  $region45: #{pred_image_forward.1} parent=0
    _
  %s6 = ssub.s32 1, %s4
  %s7 = scalar_select 0, %s6, %s4
  loop: start=0, step=1, limit=4
  $region2: #{pred_image_forward.1} parent=0 // loop_pre_header
    _
  $region3: #{pred_image_forward.1} parent=0 // loop_header
    %s9 = sphi 0, %s13
    %p10 = scmp.ge.s32.totalorder %s9, 4
    %s16 = sphi 0, %s28
    %s17 = sphi 0, %s24
    %s18 = sphi 0, %s16
    %s19 = sphi 0, %s17
    %s20 = sphi 0, %s18
    %s21 = sphi 0, %s19
    %s33 = sphi 0, %s35
    %s36 = sphi 0, %s33
    %s37 = sphi 0, %s36
    %s53 = sphi 0, %s37
    %s57 = sphi 0, %s57
    %s59 = sphi 0, %s57
    %s60 = sphi 0, %s59
    %s74 = sphi 0, %s60
    %s78 = sphi 0, %s78
    %s80 = sphi 0, %s78
    %s81 = sphi 0, %s80
    %s95 = sphi 0, %s81
    %s103 = sphi 0, %s105
    %s106 = sphi 0, %s103
    %s107 = sphi 0, %s106
    %s123 = sphi 0, %s107
  $region4: #{pred_image_forward.1} parent=0 // loop_header_branch
    %12 = sbr.rel (%p10) target = $region8
  $region5: #{pred_image_forward.1} parent=0 // loop_body
    %s14 = ssub.s32 %s9, 1
    %s15 = ssub.s32 %s9, 2
    %s22 = sadd.s32 1, %s17
    %p23 = scmp.ge.s32.totalorder %s22, 1
    %s24 = scalar_select %p23, 0, %s22
    %s25 = sadd.s32 1, %s16
    %s26 = scalar_select %p23, %s25, %s16
    %p27 = scmp.ge.s32.totalorder %s26, 2
    %s28 = scalar_select %p27, 0, %s26
    %s29 = ssub.s32 %s16, %s28
    %s30 = ssub.s32 %s17, %s24
    %s31 = sor.u32 %s29, %s30
    %p32 = scmp.eq.s32.totalorder %s31, 0
    %s34 = sadd.s32 %s33, 1
    %s35 = scalar_select %p32, %s33, %s34
    %p38 = pneg %p32
    %p39 = scmp.eq.s32.totalorder %s9, 1
    %p40 = por %p38, %p39
    %p41 = scmp.ne.s32.totalorder %s33, %s36
    %p42 = scmp.eq.s32.totalorder %s9, 0
    %p43 = por %p41, %p42
    %p44 = scmp.ne.s32.totalorder %s33, %s36
    %p45 = scmp.eq.s32.totalorder %s14, 1
    %p46 = por %p44, %p45
    %p47 = scmp.ne.s32.totalorder %s36, %s37
    %p48 = scmp.eq.s32.totalorder %s14, 0
    %p49 = por %p47, %p48
    %p50 = scmp.ne.s32.totalorder %s36, %s37
    %p51 = scmp.eq.s32.totalorder %s15, 1
    %p52 = por %p50, %p51
    %p54 = scmp.ne.s32.totalorder %s37, %s53
    %p55 = scmp.eq.s32.totalorder %s15, 0
    %p56 = por %p54, %p55
    %s58 = sadd.s32 %s57, 1
    %p61 = scmp.eq.s32.totalorder %s9, 1
    %p62 = scmp.ne.s32.totalorder %s57, %s59
    %p63 = scmp.eq.s32.totalorder %s9, 0
    %p64 = por %p62, %p63
    %p65 = scmp.ne.s32.totalorder %s57, %s59
    %p66 = scmp.eq.s32.totalorder %s14, 1
    %p67 = por %p65, %p66
    %p68 = scmp.ne.s32.totalorder %s59, %s60
    %p69 = scmp.eq.s32.totalorder %s14, 0
    %p70 = por %p68, %p69
    %p71 = scmp.ne.s32.totalorder %s59, %s60
    %p72 = scmp.eq.s32.totalorder %s15, 1
    %p73 = por %p71, %p72
    %p75 = scmp.ne.s32.totalorder %s60, %s74
    %p76 = scmp.eq.s32.totalorder %s15, 0
    %p77 = por %p75, %p76
    %s79 = sadd.s32 %s78, 1
    %p82 = scmp.eq.s32.totalorder %s9, 1
    %p83 = scmp.ne.s32.totalorder %s78, %s80
    %p84 = scmp.eq.s32.totalorder %s9, 0
    %p85 = por %p83, %p84
    %p86 = scmp.ne.s32.totalorder %s78, %s80
    %p87 = scmp.eq.s32.totalorder %s14, 1
    %p88 = por %p86, %p87
    %p89 = scmp.ne.s32.totalorder %s80, %s81
    %p90 = scmp.eq.s32.totalorder %s14, 0
    %p91 = por %p89, %p90
    %p92 = scmp.ne.s32.totalorder %s80, %s81
    %p93 = scmp.eq.s32.totalorder %s15, 1
    %p94 = por %p92, %p93
    %p96 = scmp.ne.s32.totalorder %s81, %s95
    %p97 = scmp.eq.s32.totalorder %s15, 0
    %p98 = por %p96, %p97
    %s99 = ssub.s32 %s16, %s28
    %s100 = ssub.s32 %s17, %s24
    %s101 = sor.u32 %s99, %s100
    %p102 = scmp.eq.s32.totalorder %s101, 0
    %s104 = sadd.s32 %s103, 1
    %s105 = scalar_select %p102, %s103, %s104
    %p108 = pneg %p102
    %p109 = scmp.eq.s32.totalorder %s9, 1
    %p110 = por %p108, %p109
    %p111 = scmp.ne.s32.totalorder %s103, %s106
    %p112 = scmp.eq.s32.totalorder %s9, 0
    %p113 = por %p111, %p112
    %p114 = scmp.ne.s32.totalorder %s103, %s106
    %p115 = scmp.eq.s32.totalorder %s14, 1
    %p116 = por %p114, %p115
    %p117 = scmp.ne.s32.totalorder %s106, %s107
    %p118 = scmp.eq.s32.totalorder %s14, 0
    %p119 = por %p117, %p118
    %p120 = scmp.ne.s32.totalorder %s106, %s107
    %p121 = scmp.eq.s32.totalorder %s15, 1
    %p122 = por %p120, %p121
    %p124 = scmp.ne.s32.totalorder %s107, %s123
    %p125 = scmp.eq.s32.totalorder %s15, 0
    %p126 = por %p124, %p125
    %p127 = scmp.le.s32.totalorder 1, %s9
    %p128 = scmp.lt.s32.totalorder %s9, 3
    %p129 = pnand %p127, %p128
    %p130 = pneg %p129
    // Predicated region
    $region9: #{pred_image_forward.1} parent=5 // pred_check
      _
    $region10: #{pred_image_forward.1} parent=5 // pred_check_branch
      %132 = sbr.rel (%p129) target = $region12
    $region11: #{pred_image_forward.1} parent=5 // pred_region
      %s133 = ssub.s32 %s9, 1
      // Predicated region
      $region13: #{pred_image_forward.1} parent=11 // pred_check
        %p134 = pneg %p70
      $region14: #{pred_image_forward.1} parent=11 // pred_check_branch
        %136 = sbr.rel (%p134) target = $region16
      $region15: #{pred_image_forward.1} parent=11 // pred_region
        _
      $region16: #{pred_image_forward.1} parent=11 // pred_fallthru
        _
      // Predicated region
      $region17: #{pred_image_forward.1} parent=11 // pred_check
        %p137 = pneg %p91
      $region18: #{pred_image_forward.1} parent=11 // pred_check_branch
        %139 = sbr.rel (%p137) target = $region20
      $region19: #{pred_image_forward.1} parent=11 // pred_region
        _
      $region20: #{pred_image_forward.1} parent=11 // pred_fallthru
        _
    $region12: #{pred_image_forward.1} parent=5 // pred_fallthru
      _
    %p140 = scmp.lt.s32.totalorder %s9, 2
    // Predicated region
    $region21: #{pred_image_forward.1} parent=5 // pred_check
      %p141 = pneg %p140
    $region22: #{pred_image_forward.1} parent=5 // pred_check_branch
      %143 = sbr.rel (%p141) target = $region24
    $region23: #{pred_image_forward.1} parent=5 // pred_region
      // Predicated region
      $region25: #{pred_image_forward.1} parent=23 // pred_check
        %p144 = pneg %p43
      $region26: #{pred_image_forward.1} parent=23 // pred_check_branch
        %146 = sbr.rel (%p144) target = $region28
      $region27: #{pred_image_forward.1} parent=23 // pred_region
        %p147 = scmp.lt.s32.totalorder %s16, 1
        %s148 = scalar_select %p147, %s16, 1
        %p149 = scmp.lt.s32.totalorder %s17, 0
        %s150 = scalar_select %p149, %s17, 0
        %s151 = smul.addr %s150, 4
        %s152 = smul.addr %s148, 4
        %s153 = sadd.s32 %s151, %s152
        %s154 = smul.addr %s153, 8
        %s155 = scalar_lea.vmem %s0, %s154
      $region28: #{pred_image_forward.1} parent=23 // pred_fallthru
        _
    $region24: #{pred_image_forward.1} parent=5 // pred_fallthru
      _
    %p156 = scmp.le.s32.totalorder 1, %s9
    %p157 = scmp.lt.s32.totalorder %s9, 3
    %p158 = pnand %p156, %p157
    %p159 = pneg %p158
    // Predicated region
    $region29: #{pred_image_forward.1} parent=5 // pred_check
      _
    $region30: #{pred_image_forward.1} parent=5 // pred_check_branch
      %161 = sbr.rel (%p158) target = $region32
    $region31: #{pred_image_forward.1} parent=5 // pred_region
      %s162 = ssub.s32 %s9, 1
      %p163 = scmp.lt.s32.totalorder %s18, 1
      %s164 = scalar_select %p163, %s18, 1
      %p165 = scmp.lt.s32.totalorder %s19, 0
      %s166 = scalar_select %p165, %s19, 0
      %s167 = smul.addr %s166, 4
      %s168 = smul.addr %s164, 4
      %s169 = sadd.s32 %s167, %s168
      %s170 = smul.addr %s169, 8
      %s171 = scalar_lea.vmem %s0, %s170
      %p172 = pneg %p49
      %p173 = pneg %p46
      %p174 = pneg %p70
      %p175 = pneg %p67
      %p176 = pneg %p91
      %p177 = pneg %p88
      %p178 = pneg %p119
      %p179 = pneg %p116
      %s180 = smul.u32 3, %s19
      %p181 = scmp.lt.s32.totalorder %s18, 1
      %s182 = scalar_select %p181, %s18, 1
      %p183 = scmp.lt.s32.totalorder %s180, 2
      %s184 = scalar_select %p183, %s180, 2
      %s185 = smul.addr %s182, 3
      %s186 = sadd.s32 %s184, %s185
      %s187 = smul.addr %s186, 8
      %s188 = scalar_lea.vmem %s3, %s187
      %p189 = scmp.lt.s32.totalorder %s18, 1
      %s190 = scalar_select %p189, %s18, 1
      %p191 = scmp.lt.s32.totalorder %s19, 0
      %s192 = scalar_select %p191, %s19, 0
      %s193 = smul.addr %s192, 4
      %s194 = smul.addr %s190, 4
      %s195 = sadd.s32 %s193, %s194
      %s196 = smul.addr %s195, 8
      %s197 = scalar_lea.vmem %s0, %s196
      %s198 = smul.u32 3, %s19
      %p199 = scmp.lt.s32.totalorder %s18, 1
      %s200 = scalar_select %p199, %s18, 1
      %p201 = scmp.lt.s32.totalorder %s198, 2
      %s202 = scalar_select %p201, %s198, 2
      %s203 = smul.addr %s200, 3
      %s204 = sadd.s32 %s202, %s203
      %s205 = smul.addr %s204, 8
      %s206 = scalar_lea.vmem %s3, %s205
      %s207 = smul.u32 3, %s19
      %v208 = vld [vmem:[%s197] sm:$0xff]
      %v209 = vld [vmem:[%s197 + $0x8] sm:$0xff]
      %v210 = vld [vmem:[%s197 + $0x10] sm:$0xff]
      %211 = vst [vmem:[#allocation2] sm:$0xff] %v208
      %212 = vst [vmem:[#allocation2 + $0x8] sm:$0xff] %v209
      %213 = vst [vmem:[#allocation2 + $0x10] sm:$0xff] %v210
      %v214 = vld [vmem:[%s197] sm:$0xff]
      %v215 = vld [vmem:[%s197 + $0x8] sm:$0xff]
      %v216 = vld [vmem:[%s197 + $0x10] sm:$0xff]
      %v217 = vld [vmem:[%s197 + $0x18] sm:$0xff]
      %222 = vrot.lane.b32.xlu0 %v214, 127
      %v223 = vpop.permute.xlu0 %222
      %224 = vrot.lane.b32.xlu0 %v215, 127
      %v225 = vpop.permute.xlu0 %224
      %226 = vrot.lane.b32.xlu0 %v216, 127
      %v227 = vpop.permute.xlu0 %226
      %228 = vrot.lane.b32.xlu0 %v217, 127
      %v229 = vpop.permute.xlu0 %228
      %vm230 = vcmask 1039360
      %v231 = vsel %vm230, %v223, %v225
      %v232 = vsel %vm230, %v225, %v227
      %v233 = vsel %vm230, %v227, %v229
      %237 = vst [vmem:[#allocation2 + $0x18] sm:$0xff] %v231
      %238 = vst [vmem:[#allocation2 + $0x20] sm:$0xff] %v232
      %239 = vst [vmem:[#allocation2 + $0x28] sm:$0xff] %v233
      %v240 = vld [vmem:[%s197] sm:$0xff]
      %v241 = vld [vmem:[%s197 + $0x8] sm:$0xff]
      %v242 = vld [vmem:[%s197 + $0x10] sm:$0xff]
      %v243 = vld [vmem:[%s197 + $0x18] sm:$0xff]
      %248 = vrot.lane.b32.xlu0 %v240, 126
      %v249 = vpop.permute.xlu0 %248
      %250 = vrot.lane.b32.xlu0 %v241, 126
      %v251 = vpop.permute.xlu0 %250
      %252 = vrot.lane.b32.xlu0 %v242, 126
      %v253 = vpop.permute.xlu0 %252
      %254 = vrot.lane.b32.xlu0 %v243, 126
      %v255 = vpop.permute.xlu0 %254
      %vm256 = vcmask 1031168
      %v257 = vsel %vm256, %v249, %v251
      %v258 = vsel %vm256, %v251, %v253
      %v259 = vsel %vm256, %v253, %v255
      %263 = vst [vmem:[#allocation2 + $0x30] sm:$0xff] %v257
      %264 = vst [vmem:[#allocation2 + $0x38] sm:$0xff] %v258
      %265 = vst [vmem:[#allocation2 + $0x40] sm:$0xff] %v259
      %v266 = vld [vmem:[%s197] sm:$0xff]
      %v267 = vld [vmem:[%s197 + $0x8] sm:$0xff]
      %v268 = vld [vmem:[%s197 + $0x10] sm:$0xff]
      %v269 = vld [vmem:[%s197 + $0x18] sm:$0xff]
      %274 = vrot.lane.b32.xlu0 %v266, 110
      %v275 = vpop.permute.xlu0 %274
      %276 = vrot.lane.b32.xlu0 %v267, 110
      %v277 = vpop.permute.xlu0 %276
      %278 = vrot.lane.b32.xlu0 %v268, 110
      %v279 = vpop.permute.xlu0 %278
      %280 = vrot.lane.b32.xlu0 %v269, 110
      %v281 = vpop.permute.xlu0 %280
      %vm282 = vcmask 900096
      %v283 = vsel %vm282, %v275, %v277
      %v284 = vsel %vm282, %v277, %v279
      %v285 = vsel %vm282, %v279, %v281
      %289 = vst [vmem:[#allocation2 + $0x48] sm:$0xff] %v283
      %290 = vst [vmem:[#allocation2 + $0x50] sm:$0xff] %v284
      %291 = vst [vmem:[#allocation2 + $0x58] sm:$0xff] %v285
      %v292 = vld [vmem:[%s197] sm:$0xff]
      %v293 = vld [vmem:[%s197 + $0x8] sm:$0xff]
      %v294 = vld [vmem:[%s197 + $0x10] sm:$0xff]
      %v295 = vld [vmem:[%s197 + $0x18] sm:$0xff]
      %300 = vrot.lane.b32.xlu0 %v292, 109
      %v301 = vpop.permute.xlu0 %300
      %302 = vrot.lane.b32.xlu0 %v293, 109
      %v303 = vpop.permute.xlu0 %302
      %304 = vrot.lane.b32.xlu0 %v294, 109
      %v305 = vpop.permute.xlu0 %304
      %306 = vrot.lane.b32.xlu0 %v295, 109
      %v307 = vpop.permute.xlu0 %306
      %vm308 = vcmask 891904
      %v309 = vsel %vm308, %v301, %v303
      %v310 = vsel %vm308, %v303, %v305
      %v311 = vsel %vm308, %v305, %v307
      %315 = vst [vmem:[#allocation2 + $0x60] sm:$0xff] %v309
      %316 = vst [vmem:[#allocation2 + $0x68] sm:$0xff] %v310
      %317 = vst [vmem:[#allocation2 + $0x70] sm:$0xff] %v311
      %v318 = vld [vmem:[%s197] sm:$0xff]
      %v319 = vld [vmem:[%s197 + $0x8] sm:$0xff]
      %v320 = vld [vmem:[%s197 + $0x10] sm:$0xff]
      %v321 = vld [vmem:[%s197 + $0x18] sm:$0xff]
      %326 = vrot.lane.b32.xlu0 %v318, 108
      %v327 = vpop.permute.xlu0 %326
      %328 = vrot.lane.b32.xlu0 %v319, 108
      %v329 = vpop.permute.xlu0 %328
      %330 = vrot.lane.b32.xlu0 %v320, 108
      %v331 = vpop.permute.xlu0 %330
      %332 = vrot.lane.b32.xlu0 %v321, 108
      %v333 = vpop.permute.xlu0 %332
      %vm334 = vcmask 883712
      %v335 = vsel %vm334, %v327, %v329
      %v336 = vsel %vm334, %v329, %v331
      %v337 = vsel %vm334, %v331, %v333
      %341 = vst [vmem:[#allocation2 + $0x78] sm:$0xff] %v335
      %342 = vst [vmem:[#allocation2 + $0x80] sm:$0xff] %v336
      %343 = vst [vmem:[#allocation2 + $0x88] sm:$0xff] %v337
      %v344 = vld [vmem:[%s197] sm:$0xff]
      %v345 = vld [vmem:[%s197 + $0x8] sm:$0xff]
      %v346 = vld [vmem:[%s197 + $0x10] sm:$0xff]
      %v347 = vld [vmem:[%s197 + $0x18] sm:$0xff]
      %352 = vrot.lane.b32.xlu0 %v344, 92
      %v353 = vpop.permute.xlu0 %352
      %354 = vrot.lane.b32.xlu0 %v345, 92
      %v355 = vpop.permute.xlu0 %354
      %356 = vrot.lane.b32.xlu0 %v346, 92
      %v357 = vpop.permute.xlu0 %356
      %358 = vrot.lane.b32.xlu0 %v347, 92
      %v359 = vpop.permute.xlu0 %358
      %vm360 = vcmask 752640
      %v361 = vsel %vm360, %v353, %v355
      %v362 = vsel %vm360, %v355, %v357
      %v363 = vsel %vm360, %v357, %v359
      %367 = vst [vmem:[#allocation2 + $0x90] sm:$0xff] %v361
      %368 = vst [vmem:[#allocation2 + $0x98] sm:$0xff] %v362
      %369 = vst [vmem:[#allocation2 + $0xa0] sm:$0xff] %v363
      %v370 = vld [vmem:[%s197] sm:$0xff]
      %v371 = vld [vmem:[%s197 + $0x8] sm:$0xff]
      %v372 = vld [vmem:[%s197 + $0x10] sm:$0xff]
      %v373 = vld [vmem:[%s197 + $0x18] sm:$0xff]
      %378 = vrot.lane.b32.xlu0 %v370, 91
      %v379 = vpop.permute.xlu0 %378
      %380 = vrot.lane.b32.xlu0 %v371, 91
      %v381 = vpop.permute.xlu0 %380
      %382 = vrot.lane.b32.xlu0 %v372, 91
      %v383 = vpop.permute.xlu0 %382
      %384 = vrot.lane.b32.xlu0 %v373, 91
      %v385 = vpop.permute.xlu0 %384
      %vm386 = vcmask 744448
      %v387 = vsel %vm386, %v379, %v381
      %v388 = vsel %vm386, %v381, %v383
      %v389 = vsel %vm386, %v383, %v385
      %393 = vst [vmem:[#allocation2 + $0xa8] sm:$0xff] %v387
      %394 = vst [vmem:[#allocation2 + $0xb0] sm:$0xff] %v388
      %395 = vst [vmem:[#allocation2 + $0xb8] sm:$0xff] %v389
      %v396 = vld [vmem:[%s197] sm:$0xff]
      %v397 = vld [vmem:[%s197 + $0x8] sm:$0xff]
      %v398 = vld [vmem:[%s197 + $0x10] sm:$0xff]
      %v399 = vld [vmem:[%s197 + $0x18] sm:$0xff]
      %404 = vrot.lane.b32.xlu0 %v396, 90
      %v405 = vpop.permute.xlu0 %404
      %406 = vrot.lane.b32.xlu0 %v397, 90
      %v407 = vpop.permute.xlu0 %406
      %408 = vrot.lane.b32.xlu0 %v398, 90
      %v409 = vpop.permute.xlu0 %408
      %410 = vrot.lane.b32.xlu0 %v399, 90
      %v411 = vpop.permute.xlu0 %410
      %vm412 = vcmask 736256
      %v413 = vsel %vm412, %v405, %v407
      %v414 = vsel %vm412, %v407, %v409
      %v415 = vsel %vm412, %v409, %v411
      %419 = vst [vmem:[#allocation2 + $0xc0] sm:$0xff] %v413
      %420 = vst [vmem:[#allocation2 + $0xc8] sm:$0xff] %v414
      %421 = vst [vmem:[#allocation2 + $0xd0] sm:$0xff] %v415
      %v422 = vld [vmem:[%s1] sm:$0xff]
      %v423 = vld [vmem:[#allocation2] sm:$0xff]
      %v424 = vld [vmem:[#allocation2 + $0x8] sm:$0xff]
      %v425 = vld [vmem:[#allocation2 + $0x10] sm:$0xff]
      %v426 = vld [vmem:[#allocation2 + $0x18] sm:$0xff]
      %v427 = vld [vmem:[#allocation2 + $0x20] sm:$0xff]
      %v428 = vld [vmem:[#allocation2 + $0x28] sm:$0xff]
      %v429 = vld [vmem:[#allocation2 + $0x30] sm:$0xff]
      %v430 = vld [vmem:[#allocation2 + $0x38] sm:$0xff]
      %v431 = vld [vmem:[#allocation2 + $0x40] sm:$0xff]
      %v432 = vld [vmem:[#allocation2 + $0x48] sm:$0xff]
      %v433 = vld [vmem:[#allocation2 + $0x50] sm:$0xff]
      %v434 = vld [vmem:[#allocation2 + $0x58] sm:$0xff]
      %v435 = vld [vmem:[#allocation2 + $0x60] sm:$0xff]
      %v436 = vld [vmem:[#allocation2 + $0x68] sm:$0xff]
      %v437 = vld [vmem:[#allocation2 + $0x70] sm:$0xff]
      %v438 = vld [vmem:[#allocation2 + $0x78] sm:$0xff]
      %v439 = vld [vmem:[#allocation2 + $0x80] sm:$0xff]
      %v440 = vld [vmem:[#allocation2 + $0x88] sm:$0xff]
      %v441 = vld [vmem:[#allocation2 + $0x90] sm:$0xff]
      %v442 = vld [vmem:[#allocation2 + $0x98] sm:$0xff]
      %v443 = vld [vmem:[#allocation2 + $0xa0] sm:$0xff]
      %v444 = vld [vmem:[#allocation2 + $0xa8] sm:$0xff]
      %v445 = vld [vmem:[#allocation2 + $0xb0] sm:$0xff]
      %v446 = vld [vmem:[#allocation2 + $0xb8] sm:$0xff]
      %v447 = vld [vmem:[#allocation2 + $0xc0] sm:$0xff]
      %v448 = vld [vmem:[#allocation2 + $0xc8] sm:$0xff]
      %v449 = vld [vmem:[#allocation2 + $0xd0] sm:$0xff]
      %v450 = vld [vmem:[%s2] sm:$0xff]
      %452 = vset.pattern.permute.xlu0 0
      %453 = vperm.xlu0 %452, %v450
      %v454 = vpop.permute.xlu0 %453
      %vm456 = vcmask 588800
      %v458 = vsel %vm456, %v422, 0
      %460 = vmatprep.subr.mxu0 %v424
      %461 = vmatpush1.msra.mxu0 %v423
      %462 = vmatprep.subr.mxu0 %v427
      %463 = vmatpush1.msra.mxu0 %v426
      %464 = vmatprep.subr.mxu0 %v430
      %465 = vmatpush1.msra.mxu0 %v429
      %466 = vmatprep.subr.mxu0 %v433
      %467 = vmatpush1.msra.mxu0 %v432
      %468 = vmatprep.subr.mxu0 %v436
      %469 = vmatpush1.msra.mxu0 %v435
      %470 = vmatprep.subr.mxu0 %v439
      %471 = vmatpush1.msra.mxu0 %v438
      %472 = vmatprep.subr.mxu0 %v442
      %473 = vmatpush1.msra.mxu0 %v441
      %474 = vmatprep.subr.mxu0 %v445
      %475 = vmatpush1.msra.mxu0 %v444
      %476 = vmatprep.subr.mxu0 %v448
      %477 = vmatpush1.msra.mxu0 %v447
      %478 = vmatprep.subr.mxu0 0.0
      %479 = vmatpush1.msra.mxu0 0.0
      %480 = vmatprep.subr.mxu0 0.0
      %481 = vmatpush1.msra.mxu0 0.0
      %482 = vmatprep.subr.mxu0 0.0
      %483 = vmatpush1.msra.mxu0 0.0
      %484 = vmatprep.subr.mxu0 0.0
      %485 = vmatpush1.msra.mxu0 0.0
      %486 = vmatprep.subr.mxu0 0.0
      %487 = vmatpush1.msra.mxu0 0.0
      %488 = vmatprep.subr.mxu0 0.0
      %489 = vmatpush1.msra.mxu0 0.0
      %490 = vmatprep.subr.mxu0 0.0
      %491 = vmatpush1.msra.mxu0 0.0
      %492 = vmatprep.subr.mxu0 0.0
      %493 = vmatpush1.msra.mxu0 0.0
      %494 = vmatprep.subr.mxu0 0.0
      %495 = vmatpush1.msra.mxu0 0.0
      %496 = vmatprep.subr.mxu0 0.0
      %497 = vmatpush1.msra.mxu0 0.0
      %498 = vmatprep.subr.mxu0 0.0
      %499 = vmatpush1.msra.mxu0 0.0
      %500 = vmatprep.subr.mxu0 0.0
      %501 = vmatpush1.msra.mxu0 0.0
      %502 = vmatprep.subr.mxu0 0.0
      %503 = vmatpush1.msra.mxu0 0.0
      %504 = vmatprep.subr.mxu0 0.0
      %505 = vmatpush1.msra.mxu0 0.0
      %506 = vmatprep.subr.mxu0 0.0
      %507 = vmatpush1.msra.mxu0 0.0
      %508 = vmatprep.subr.mxu0 0.0
      %509 = vmatpush1.msra.mxu0 0.0
      %510 = vmatprep.subr.mxu0 0.0
      %511 = vmatpush1.msra.mxu0 0.0
      %512 = vmatprep.subr.mxu0 0.0
      %513 = vmatpush1.msra.mxu0 0.0
      %514 = vmatprep.subr.mxu0 0.0
      %515 = vmatpush1.msra.mxu0 0.0
      %516 = vmatprep.subr.mxu0 0.0
      %517 = vmatpush1.msra.mxu0 0.0
      %518 = vmatprep.subr.mxu0 0.0
      %519 = vmatpush1.msra.mxu0 0.0
      %520 = vmatprep.subr.mxu0 0.0
      %521 = vmatpush1.msra.mxu0 0.0
      %522 = vmatprep.subr.mxu0 0.0
      %523 = vmatpush1.msra.mxu0 0.0
      %524 = vmatprep.mubr.f32.mxu0 0.0
      %525 = vmatmul.mubr.f32.gmra.mrb[0].mxu0 %v458
      %v526 = vpop.f32.mrb[0].mxu0
      %v527 = vadd.f32 %v454, %v526
      %v528 = vpop.f32.mrb[0].mxu0
      %v529 = vadd.f32 %v454, %v528
      %530 = vdwg.mxu0
      %531 = vmatprep.subr.mxu0 0.0
      %532 = vmatpush1.msra.mxu0 %v425
      %533 = vmatprep.subr.mxu0 0.0
      %534 = vmatpush1.msra.mxu0 %v428
      %535 = vmatprep.subr.mxu0 0.0
      %536 = vmatpush1.msra.mxu0 %v431
      %537 = vmatprep.subr.mxu0 0.0
      %538 = vmatpush1.msra.mxu0 %v434
      %539 = vmatprep.subr.mxu0 0.0
      %540 = vmatpush1.msra.mxu0 %v437
      %541 = vmatprep.subr.mxu0 0.0
      %542 = vmatpush1.msra.mxu0 %v440
      %543 = vmatprep.subr.mxu0 0.0
      %544 = vmatpush1.msra.mxu0 %v443
      %545 = vmatprep.subr.mxu0 0.0
      %546 = vmatpush1.msra.mxu0 %v446
      %547 = vmatprep.subr.mxu0 0.0
      %548 = vmatpush1.msra.mxu0 %v449
      %549 = vmatprep.subr.mxu0 0.0
      %550 = vmatpush1.msra.mxu0 0.0
      %551 = vmatprep.subr.mxu0 0.0
      %552 = vmatpush1.msra.mxu0 0.0
      %553 = vmatprep.subr.mxu0 0.0
      %554 = vmatpush1.msra.mxu0 0.0
      %555 = vmatprep.subr.mxu0 0.0
      %556 = vmatpush1.msra.mxu0 0.0
      %557 = vmatprep.subr.mxu0 0.0
      %558 = vmatpush1.msra.mxu0 0.0
      %559 = vmatprep.subr.mxu0 0.0
      %560 = vmatpush1.msra.mxu0 0.0
      %561 = vmatprep.subr.mxu0 0.0
      %562 = vmatpush1.msra.mxu0 0.0
      %563 = vmatprep.subr.mxu0 0.0
      %564 = vmatpush1.msra.mxu0 0.0
      %565 = vmatprep.subr.mxu0 0.0
      %566 = vmatpush1.msra.mxu0 0.0
      %567 = vmatprep.subr.mxu0 0.0
      %568 = vmatpush1.msra.mxu0 0.0
      %569 = vmatprep.subr.mxu0 0.0
      %570 = vmatpush1.msra.mxu0 0.0
      %571 = vmatprep.subr.mxu0 0.0
      %572 = vmatpush1.msra.mxu0 0.0
      %573 = vmatprep.subr.mxu0 0.0
      %574 = vmatpush1.msra.mxu0 0.0
      %575 = vmatprep.subr.mxu0 0.0
      %576 = vmatpush1.msra.mxu0 0.0
      %577 = vmatprep.subr.mxu0 0.0
      %578 = vmatpush1.msra.mxu0 0.0
      %579 = vmatprep.subr.mxu0 0.0
      %580 = vmatpush1.msra.mxu0 0.0
      %581 = vmatprep.subr.mxu0 0.0
      %582 = vmatpush1.msra.mxu0 0.0
      %583 = vmatprep.subr.mxu0 0.0
      %584 = vmatpush1.msra.mxu0 0.0
      %585 = vmatprep.subr.mxu0 0.0
      %586 = vmatpush1.msra.mxu0 0.0
      %587 = vmatprep.subr.mxu0 0.0
      %588 = vmatpush1.msra.mxu0 0.0
      %589 = vmatprep.subr.mxu0 0.0
      %590 = vmatpush1.msra.mxu0 0.0
      %591 = vmatprep.subr.mxu0 0.0
      %592 = vmatpush1.msra.mxu0 0.0
      %593 = vmatprep.subr.mxu0 0.0
      %594 = vmatpush1.msra.mxu0 0.0
      %595 = vmatprep.mubr.f32.mxu0 0.0
      %596 = vmatmul.mubr.f32.gmra.mrb[0].mxu0 %v458
      %v597 = vpop.f32.mrb[0].mxu0
      %v598 = vadd.f32 %v454, %v597
      %v599 = vpop.f32.mrb[0].mxu0
      %600 = vdwg.mxu0
      %v601 = vmul.f32 %v527, 0.1
      %v602 = vmul.f32 %v529, 0.1
      %v603 = vmul.f32 %v598, 0.1
      %v604 = vmax.f32 %v527, %v601
      %v605 = vmax.f32 %v529, %v602
      %v606 = vmax.f32 %v598, %v603
      %607 = vst [vmem:[%s206] sm:$0xff] %v604
      %608 = vst [vmem:[%s206 + $0x8] sm:$0xff] %v605
      %609 = vst [vmem:[%s206 + $0x10] sm:$0xff] %v606
      %s610 = smul.u32 3, %s19
      %p611 = scmp.lt.s32.totalorder %s18, 1
      %s612 = scalar_select %p611, %s18, 1
      %p613 = scmp.lt.s32.totalorder %s610, 2
      %s614 = scalar_select %p613, %s610, 2
      %s615 = smul.addr %s612, 3
      %s616 = sadd.s32 %s614, %s615
      %s617 = smul.addr %s616, 8
      %s618 = scalar_lea.vmem %s3, %s617
      // Predicated region
      $region33: #{pred_image_forward.1} parent=31 // pred_check
        %p619 = pneg %p116
      $region34: #{pred_image_forward.1} parent=31 // pred_check_branch
        %621 = sbr.rel (%p619) target = $region36
      $region35: #{pred_image_forward.1} parent=31 // pred_region
        %s622 = smul.u32 3, %s19
      $region36: #{pred_image_forward.1} parent=31 // pred_fallthru
        _
    $region32: #{pred_image_forward.1} parent=5 // pred_fallthru
      _
    %p623 = scmp.le.s32.totalorder 2, %s9
    // Predicated region
    $region37: #{pred_image_forward.1} parent=5 // pred_check
      %p624 = pneg %p623
    $region38: #{pred_image_forward.1} parent=5 // pred_check_branch
      %626 = sbr.rel (%p624) target = $region40
    $region39: #{pred_image_forward.1} parent=5 // pred_region
      %s627 = ssub.s32 %s9, 2
      // Predicated region
      $region41: #{pred_image_forward.1} parent=39 // pred_check
        %p628 = pneg %p122
      $region42: #{pred_image_forward.1} parent=39 // pred_check_branch
        %630 = sbr.rel (%p628) target = $region44
      $region43: #{pred_image_forward.1} parent=39 // pred_region
        %s631 = smul.u32 3, %s21
        %p632 = scmp.lt.s32.totalorder %s20, 1
        %s633 = scalar_select %p632, %s20, 1
        %p634 = scmp.lt.s32.totalorder %s631, 2
        %s635 = scalar_select %p634, %s631, 2
        %s636 = smul.addr %s633, 3
        %s637 = sadd.s32 %s635, %s636
        %s638 = smul.addr %s637, 8
        %s639 = scalar_lea.vmem %s3, %s638
      $region44: #{pred_image_forward.1} parent=39 // pred_fallthru
        _
    $region40: #{pred_image_forward.1} parent=5 // pred_fallthru
      _
  $region6: #{pred_image_forward.1} parent=0 // loop_footer
    %s13 = sadd.s32 1, %s9
  $region7: #{pred_image_forward.1} parent=0 // loop_footer_branch
    %8 = sbr.rel target = $region3
  $region8: #{pred_image_forward.1} parent=0 // loop_exit
    _

</llo_original>
